<compile_context>
chip_gen: v7x
topology: tpu7x:2x2x1
jax: 0.10.0
libtpu: 0.0.40
codegen_flags: <defaults>
</compile_context>

<pallas_src>
import functools

import jax
import jax.numpy as jnp
from jax.experimental import pallas as pl
from jax.experimental.pallas import tpu as pltpu

LANE = 128


def _round_up(x, m):
    return ((x + m - 1) // m) * m


def _pad2(a, rows, cols):
    r, c = a.shape
    return jnp.pad(a, ((0, rows - r), (0, cols - c)))


def _vmem_limit_bytes():
    """Generation-aware VMEM limit: physical capacity minus scratch headroom."""
    cap = 128 * 1024 * 1024                       # v5e / v6e physical VMEM
    try:
        cap = int(getattr(pltpu.get_tpu_info(), "vmem_capacity_bytes", cap))
    except Exception:
        pass
    return max(cap - 12 * 1024 * 1024, 32 * 1024 * 1024)


# --------------------------------------------------------------------------
# Kernels
# --------------------------------------------------------------------------
def gcn_layer1_kernel(a_ref, xw1_ref, w2_ref, b1_ref, hw2_ref):
    """hw2_tile = relu(A_tile @ (X@W1) + b1) @ W2   (f32 acc, bf16 out)."""
    z1 = jnp.dot(a_ref[...], xw1_ref[...], preferred_element_type=jnp.float32)
    h = jnp.maximum(z1 + b1_ref[...], 0.0)                     # f32 epilogue
    hw2_ref[...] = jnp.dot(h.astype(w2_ref.dtype), w2_ref[...],
                           preferred_element_type=jnp.float32
                           ).astype(hw2_ref.dtype)


def gcn_layer2_kernel(a_ref, hw2_ref, b2_ref, o_ref, *, num_classes):
    """o_tile = log_softmax(A_tile @ (H@W2) + b2) over the real class cols."""
    z = jnp.dot(a_ref[...], hw2_ref[...],
                preferred_element_type=jnp.float32) + b2_ref[...]
    col = jax.lax.broadcasted_iota(jnp.int32, z.shape, 1)
    valid = col < num_classes
    z_masked = jnp.where(valid, z, -jnp.inf)
    m = jnp.max(z_masked, axis=1, keepdims=True)
    e = jnp.where(valid, jnp.exp(z - m), 0.0)
    lse = jnp.log(jnp.sum(e, axis=1, keepdims=True))
    o_ref[...] = z - m - lse


# --------------------------------------------------------------------------
# Wrapper
# --------------------------------------------------------------------------
def _forward_padded(a_p, xw1_p, w2_p, b1_p, b2_p, *, tm, num_classes,
                    vmem_limit, single_buffer_residents):
    n_pad = a_p.shape[0]
    h_pad = xw1_p.shape[1]
    c_pad = w2_p.shape[1]
    grid = (n_pad // tm,)

    params = pltpu.CompilerParams(
        dimension_semantics=("parallel",),
        vmem_limit_bytes=vmem_limit,
    )

    a_spec = pl.BlockSpec((tm, n_pad), lambda i: (i, 0))   # streamed, 2-buf

    def resident(rows, cols):
        if single_buffer_residents:
            return pl.BlockSpec((rows, cols), lambda i: (0, 0),
                                pipeline_mode=pl.Buffered(1))
        return pl.BlockSpec((rows, cols), lambda i: (0, 0))

    # ---- layer 1: HW2 = relu(A @ XW1 + b1) @ W2, bf16 [n_pad, c_pad] ----
    hw2_bf = pl.pallas_call(
        gcn_layer1_kernel,
        out_shape=jax.ShapeDtypeStruct((n_pad, c_pad), jnp.bfloat16),
        grid=grid,
        in_specs=[a_spec,
                  resident(n_pad, h_pad),
                  resident(h_pad, c_pad),
                  resident(1, h_pad)],
        out_specs=pl.BlockSpec((tm, c_pad), lambda i: (i, 0)),
        compiler_params=params,
    )(a_p, xw1_p, w2_p, b1_p)

    # ---- layer 2: log_softmax(A @ HW2 + b2), f32 [n_pad, c_pad] ----
    out_p = pl.pallas_call(
        functools.partial(gcn_layer2_kernel, num_classes=num_classes),
        out_shape=jax.ShapeDtypeStruct((n_pad, c_pad), jnp.float32),
        grid=grid,
        in_specs=[a_spec,
                  resident(n_pad, c_pad),
                  resident(1, c_pad)],
        out_specs=pl.BlockSpec((tm, c_pad), lambda i: (i, 0)),
        compiler_params=params,
    )(a_p, hw2_bf, b2_p)
    return out_p


def gcn_forward(a_hat, x, w1, b1, w2, b2):
    n, _ = x.shape
    h_dim = w1.shape[1]
    c = w2.shape[1]

    h_pad = _round_up(h_dim, LANE)
    c_pad = _round_up(c, LANE)

    vmem_limit = _vmem_limit_bytes()
    budget = int(0.75 * vmem_limit)

    # Row tile: large slabs for the HBM roofline, but >= 2 tiles when possible
    # so the "parallel" grid axis shards across v7x's two TensorCores.
    tm = min(512, _round_up(n, 16))
    if n > 16 and _round_up(n, tm) // tm < 2:
        tm = _round_up(-(-n // 2), 16)
    while tm > 16:
        n_pad = _round_up(n, tm)
        need = (2 * tm * n_pad * 2                 # A slab, bf16, double-buffered
                + 2 * tm * c_pad * 4               # output tile, f32, double-buffered
                + n_pad * max(h_pad, c_pad) * 2    # resident XW1 / HW2, bf16, 1-buf
                + h_pad * c_pad * 2                # resident W2, bf16
                + (h_pad + c_pad) * 4)             # biases, f32
        if need <= budget:
            break
        tm = max(16, _round_up(tm // 2, 16))
    n_pad = _round_up(n, tm)

    # Pad operands; fold X @ W1 into the wrapper (f32, one bf16 cast); biases
    # stay f32; A_hat is cast to bf16 once for the MXU.
    a_p = _pad2(a_hat, n_pad, n_pad).astype(jnp.bfloat16)
    xw1 = x.astype(jnp.float32) @ w1.astype(jnp.float32)
    xw1_p = _pad2(xw1, n_pad, h_pad).astype(jnp.bfloat16)
    w2_p = _pad2(w2, h_pad, c_pad).astype(jnp.bfloat16)
    b1_p = _pad2(b1.reshape(1, -1), 1, h_pad).astype(jnp.float32)
    b2_p = _pad2(b2.reshape(1, -1), 1, c_pad).astype(jnp.float32)

    try:
        out_p = _forward_padded(a_p, xw1_p, w2_p, b1_p, b2_p, tm=tm,
                                num_classes=c, vmem_limit=vmem_limit,
                                single_buffer_residents=True)
    except Exception:
        # Fallback for jax versions where pl.Buffered(1) is not accepted.
        out_p = _forward_padded(a_p, xw1_p, w2_p, b1_p, b2_p, tm=tm,
                                num_classes=c, vmem_limit=vmem_limit,
                                single_buffer_residents=False)
    return out_p[:n, :c]


# --------------------------------------------------------------------------
# Plain-JAX glue + reference
# --------------------------------------------------------------------------
def normalized_adjacency(edge_index, num_nodes):
    """GCN normalization: D^{-1/2} (A + I) D^{-1/2}."""
    src, dst = edge_index[0], edge_index[1]
    a = jnp.zeros((num_nodes, num_nodes), jnp.float32)
    a = a.at[dst, src].set(1.0)                      # messages flow src -> dst
    a = a + jnp.eye(num_nodes, dtype=jnp.float32)    # self-loops
    deg = jnp.sum(a, axis=1)
    d_inv_sqrt = 1.0 / jnp.sqrt(deg)
    return a * d_inv_sqrt[:, None] * d_inv_sqrt[None, :]


def gcn_reference(a_hat, x, w1, b1, w2, b2):
    """Pure-JAX f32 reference for correctness checking."""
    h = jnp.maximum(a_hat @ (x @ w1) + b1, 0.0)
    z = a_hat @ (h @ w2) + b2
    m = jnp.max(z, axis=1, keepdims=True)
    return (z - m) - jnp.log(jnp.sum(jnp.exp(z - m), axis=1, keepdims=True))


if __name__ == "__main__":
    # Small synthetic problem consistent with the module:
    #   N nodes, 25 URL features, hidden=16, num_classes=2,
    #   fully-connected edge_index (all i != j) as in the reference script.
    N = 8
    NUM_FEATURES = 25
    HIDDEN = 16
    NUM_CLASSES = 2

    key = jax.random.PRNGKey(0)
    k_x, k_w1, k_b1, k_w2, k_b2 = jax.random.split(key, 5)

    x = jax.random.normal(k_x, (N, NUM_FEATURES), jnp.float32)

    pairs = [(i, j) for i in range(N) for j in range(N) if i != j]
    edge_index = jnp.array(pairs, dtype=jnp.int32).T

    a_hat = normalized_adjacency(edge_index, N)

    w1 = jax.random.normal(k_w1, (NUM_FEATURES, HIDDEN), jnp.float32) / jnp.sqrt(
        float(NUM_FEATURES))
    b1 = jax.random.normal(k_b1, (1, HIDDEN), jnp.float32) * 0.01
    w2 = jax.random.normal(k_w2, (HIDDEN, NUM_CLASSES), jnp.float32) / jnp.sqrt(
        float(HIDDEN))
    b2 = jax.random.normal(k_b2, (1, NUM_CLASSES), jnp.float32) * 0.01

    out = gcn_forward(a_hat, x, w1, b1, w2, b2)
    out = jax.block_until_ready(out)

    # sanity 1: log_softmax rows must exponentiate-sum to 1
    row_sums = jnp.sum(jnp.exp(out), axis=1)
    assert out.shape == (N, NUM_CLASSES)
    assert bool(jnp.all(jnp.abs(row_sums - 1.0) < 1e-4))

    # sanity 2: matches the f32 reference (loose tol: bf16 MXU inputs)
    ref = gcn_reference(a_hat, x, w1, b1, w2, b2)
    assert bool(jnp.max(jnp.abs(out - ref)) < 0.1)

    print("KERNEL_OK")
</pallas_src>

<mosaic_0001>
module attributes {stable_mosaic.version = 11 : i64} {
  func.func @gcn_layer1_kernel(%arg0: i32, %arg1: memref<16x16xbf16, #tpu.memory_space<vmem>>, %arg2: memref<16x128xbf16, #tpu.memory_space<vmem>>, %arg3: memref<128x128xbf16, #tpu.memory_space<vmem>>, %arg4: memref<1x128xf32, #tpu.memory_space<vmem>>, %arg5: memref<16x128xbf16, #tpu.memory_space<vmem>>) attributes {dimension_semantics = [#tpu.dimension_semantics<parallel>], iteration_bounds = array<i64: 1>, scalar_prefetch = 0 : i64, scratch_operands = 0 : i64, tpu.core_type = #tpu.core_type<tc>, window_params = [{transform_indices = @transform_0, window_bounds = array<i64: 16, 16>}, {pipeline_mode = #tpu.pipeline_mode<synchronous>, transform_indices = @transform_1, window_bounds = array<i64: 16, 128>}, {pipeline_mode = #tpu.pipeline_mode<synchronous>, transform_indices = @transform_2, window_bounds = array<i64: 128, 128>}, {pipeline_mode = #tpu.pipeline_mode<synchronous>, transform_indices = @transform_3, window_bounds = array<i64: 1, 128>}, {transform_indices = @transform_4, window_bounds = array<i64: 16, 128>}]} {
    %c0 = arith.constant 0 : index
    %c0_0 = arith.constant 0 : index
    %0 = vector.load %arg1[%c0, %c0_0] : memref<16x16xbf16, #tpu.memory_space<vmem>>, vector<16x16xbf16>
    %c0_1 = arith.constant 0 : index
    %c0_2 = arith.constant 0 : index
    %1 = vector.load %arg2[%c0_1, %c0_2] : memref<16x128xbf16, #tpu.memory_space<vmem>>, vector<16x128xbf16>
    %cst = arith.constant dense<0.000000e+00> : vector<16x128xf32>
    %2 = tpu.matmul %0, %1, %cst {dimension_numbers = #tpu.dot_dimension_numbers<[1], [0], [0], [1], [0, 0, 1, 1], [], []>} : vector<16x16xbf16>, vector<16x128xbf16>, vector<16x128xf32> -> vector<16x128xf32>
    %c0_3 = arith.constant 0 : index
    %c0_4 = arith.constant 0 : index
    %3 = vector.load %arg4[%c0_3, %c0_4] : memref<1x128xf32, #tpu.memory_space<vmem>>, vector<1x128xf32>
    %4 = vector.broadcast %3 : vector<1x128xf32> to vector<16x128xf32>
    %5 = arith.addf %2, %4 : vector<16x128xf32>
    %cst_5 = arith.constant 0.000000e+00 : f32
    %6 = vector.broadcast %cst_5 : f32 to vector<16x128xf32>
    %7 = arith.maximumf %5, %6 : vector<16x128xf32>
    %8 = arith.truncf %7 : vector<16x128xf32> to vector<16x128xbf16>
    %c0_6 = arith.constant 0 : index
    %c0_7 = arith.constant 0 : index
    %9 = vector.load %arg3[%c0_6, %c0_7] : memref<128x128xbf16, #tpu.memory_space<vmem>>, vector<128x128xbf16>
    %cst_8 = arith.constant dense<0.000000e+00> : vector<16x128xf32>
    %10 = tpu.matmul %8, %9, %cst_8 {dimension_numbers = #tpu.dot_dimension_numbers<[1], [0], [0], [1], [0, 0, 1, 1], [], []>} : vector<16x128xbf16>, vector<128x128xbf16>, vector<16x128xf32> -> vector<16x128xf32>
    %11 = arith.truncf %10 : vector<16x128xf32> to vector<16x128xbf16>
    %c0_9 = arith.constant 0 : index
    %c0_10 = arith.constant 0 : index
    %12 = vector.load %arg5[%c0_9, %c0_10] : memref<16x128xbf16, #tpu.memory_space<vmem>>, vector<16x128xbf16>
    tpu.vector_store %arg5[%c0_9, %c0_10], %11 {strides = array<i32>} : memref<16x128xbf16, #tpu.memory_space<vmem>>, vector<16x128xbf16>,
    return
  }
  func.func @transform_0(%arg0: i32) -> (i32, i32) {
    %c0_i32 = arith.constant 0 : i32
    %c0_i32_0 = arith.constant 0 : i32
    return %arg0, %c0_i32 : i32, i32
  }
  func.func @transform_1(%arg0: i32) -> (i32, i32) {
    %c0_i32 = arith.constant 0 : i32
    %c0_i32_0 = arith.constant 0 : i32
    %c0_i32_1 = arith.constant 0 : i32
    return %c0_i32, %c0_i32_0 : i32, i32
  }
  func.func @transform_2(%arg0: i32) -> (i32, i32) {
    %c0_i32 = arith.constant 0 : i32
    %c0_i32_0 = arith.constant 0 : i32
    %c0_i32_1 = arith.constant 0 : i32
    return %c0_i32, %c0_i32_0 : i32, i32
  }
  func.func @transform_3(%arg0: i32) -> (i32, i32) {
    %c0_i32 = arith.constant 0 : i32
    %c0_i32_0 = arith.constant 0 : i32
    %c0_i32_1 = arith.constant 0 : i32
    return %c0_i32, %c0_i32_0 : i32, i32
  }
  func.func @transform_4(%arg0: i32) -> (i32, i32) {
    %c0_i32 = arith.constant 0 : i32
    %c0_i32_0 = arith.constant 0 : i32
    return %arg0, %c0_i32 : i32, i32
  }
}

module attributes {stable_mosaic.version = 11 : i64} {
  func.func @gcn_layer1_kernel(%arg0: i32, %arg1: memref<16x16xbf16, #tpu.memory_space<vmem>>, %arg2: memref<16x128xbf16, #tpu.memory_space<vmem>>, %arg3: memref<128x128xbf16, #tpu.memory_space<vmem>>, %arg4: memref<1x128xf32, #tpu.memory_space<vmem>>, %arg5: memref<16x128xbf16, #tpu.memory_space<vmem>>) attributes {dimension_semantics = [#tpu.dimension_semantics<parallel>], iteration_bounds = array<i64: 1>, scalar_prefetch = 0 : i64, scratch_operands = 0 : i64, tpu.core_type = #tpu.core_type<tc>, window_params = [{transform_indices = @transform_0, window_bounds = array<i64: 16, 16>}, {pipeline_mode = #tpu.pipeline_mode<synchronous>, transform_indices = @transform_1, window_bounds = array<i64: 16, 128>}, {pipeline_mode = #tpu.pipeline_mode<synchronous>, transform_indices = @transform_2, window_bounds = array<i64: 128, 128>}, {pipeline_mode = #tpu.pipeline_mode<synchronous>, transform_indices = @transform_3, window_bounds = array<i64: 1, 128>}, {transform_indices = @transform_4, window_bounds = array<i64: 16, 128>}]} {
    %c0 = arith.constant 0 : index
    %c0_0 = arith.constant 0 : index
    %0 = vector.load %arg1[%c0, %c0_0] : memref<16x16xbf16, #tpu.memory_space<vmem>>, vector<16x16xbf16>
    %c0_1 = arith.constant 0 : index
    %c0_2 = arith.constant 0 : index
    %1 = vector.load %arg2[%c0_1, %c0_2] : memref<16x128xbf16, #tpu.memory_space<vmem>>, vector<16x128xbf16>
    %cst = arith.constant dense<0.000000e+00> : vector<16x128xf32>
    %2 = tpu.matmul %0, %1, %cst {dimension_numbers = #tpu.dot_dimension_numbers<[1], [0], [0], [1], [0, 0, 1, 1], [], []>} : vector<16x16xbf16>, vector<16x128xbf16>, vector<16x128xf32> -> vector<16x128xf32>
    %c0_3 = arith.constant 0 : index
    %c0_4 = arith.constant 0 : index
    %3 = vector.load %arg4[%c0_3, %c0_4] : memref<1x128xf32, #tpu.memory_space<vmem>>, vector<1x128xf32>
    %4 = vector.broadcast %3 : vector<1x128xf32> to vector<16x128xf32>
    %5 = arith.addf %2, %4 : vector<16x128xf32>
    %cst_5 = arith.constant 0.000000e+00 : f32
    %6 = vector.broadcast %cst_5 : f32 to vector<16x128xf32>
    %7 = arith.maximumf %5, %6 : vector<16x128xf32>
    %8 = arith.truncf %7 : vector<16x128xf32> to vector<16x128xbf16>
    %c0_6 = arith.constant 0 : index
    %c0_7 = arith.constant 0 : index
    %9 = vector.load %arg3[%c0_6, %c0_7] : memref<128x128xbf16, #tpu.memory_space<vmem>>, vector<128x128xbf16>
    %cst_8 = arith.constant dense<0.000000e+00> : vector<16x128xf32>
    %10 = tpu.matmul %8, %9, %cst_8 {dimension_numbers = #tpu.dot_dimension_numbers<[1], [0], [0], [1], [0, 0, 1, 1], [], []>} : vector<16x128xbf16>, vector<128x128xbf16>, vector<16x128xf32> -> vector<16x128xf32>
    %11 = arith.truncf %10 : vector<16x128xf32> to vector<16x128xbf16>
    %c0_9 = arith.constant 0 : index
    %c0_10 = arith.constant 0 : index
    %12 = vector.load %arg5[%c0_9, %c0_10] : memref<16x128xbf16, #tpu.memory_space<vmem>>, vector<16x128xbf16>
    tpu.vector_store %arg5[%c0_9, %c0_10], %11 {strides = array<i32>} : memref<16x128xbf16, #tpu.memory_space<vmem>>, vector<16x128xbf16>,
    return
  }
  func.func @transform_0(%arg0: i32) -> (i32, i32) {
    %c0_i32 = arith.constant 0 : i32
    %c0_i32_0 = arith.constant 0 : i32
    return %arg0, %c0_i32 : i32, i32
  }
  func.func @transform_1(%arg0: i32) -> (i32, i32) {
    %c0_i32 = arith.constant 0 : i32
    %c0_i32_0 = arith.constant 0 : i32
    %c0_i32_1 = arith.constant 0 : i32
    return %c0_i32, %c0_i32_0 : i32, i32
  }
  func.func @transform_2(%arg0: i32) -> (i32, i32) {
    %c0_i32 = arith.constant 0 : i32
    %c0_i32_0 = arith.constant 0 : i32
    %c0_i32_1 = arith.constant 0 : i32
    return %c0_i32, %c0_i32_0 : i32, i32
  }
  func.func @transform_3(%arg0: i32) -> (i32, i32) {
    %c0_i32 = arith.constant 0 : i32
    %c0_i32_0 = arith.constant 0 : i32
    %c0_i32_1 = arith.constant 0 : i32
    return %c0_i32, %c0_i32_0 : i32, i32
  }
  func.func @transform_4(%arg0: i32) -> (i32, i32) {
    %c0_i32 = arith.constant 0 : i32
    %c0_i32_0 = arith.constant 0 : i32
    return %arg0, %c0_i32 : i32, i32
  }
}

</mosaic_0001>

<llo_original>
// kernel: tpu_custom_call.1
$region0: #{tpu_custom_call.1}
  #allocation0 [shape = 'u32[]', space=smem, size = 0x4, offset = 0x4, fixed_abs, tag = 'smem constant byte address 0x4 - core index']
  #allocation1 [shape = 'u32[144,128]{1,0:T(1,128)}', space=vmem, size = 0x12000, scoped, tag = 'internal scratch']
  %s0 = inlined_call_operand.hbm [shape: bf16[16,16], index: 0, kind: input, shape index: {}]
  %s1 = inlined_call_operand.hbm [shape: bf16[16,128], index: 1, kind: input, shape index: {}]
  %s2 = inlined_call_operand.hbm [shape: bf16[128,128], index: 2, kind: input, shape index: {}]
  %s3 = inlined_call_operand.hbm [shape: f32[1,128], index: 3, kind: input, shape index: {}]
  %s4 = inlined_call_operand.hbm [shape: bf16[16,128], index: 4, kind: output, shape index: {}]
  %s5 = sld [smem:[#allocation0]]
  $region42: #{tpu_custom_call.1} parent=0
    _
  %s7 = ssub.s32 1, %s5
  %s8 = scalar_select 0, %s7, %s5
  $region1: #{tpu_custom_call.1} parent=0
    #allocation2 [shape = 'u8[4096]{0}', space=vmem, size = 0x1000, scoped, tag = 'input window, operand 0, single buffered']
    #allocation3 [shape = 's32[1]{0}', space=sflag, size = 0x4, scoped, tag = 'scoped memory for tpu_custom_call.1']
    #allocation4 [shape = 's32[1]{0}', space=sflag, size = 0x4, scoped, tag = 'scoped memory for tpu_custom_call.1']
    #allocation5 [shape = 'u8[4096]{0}', space=vmem, size = 0x1000, scoped, tag = 'input window, operand 1, single buffered']
    #allocation6 [shape = 's32[1]{0}', space=sflag, size = 0x4, scoped, tag = 'scoped memory for tpu_custom_call.1']
    #allocation7 [shape = 'u8[32768]{0}', space=vmem, size = 0x8000, scoped, tag = 'input window, operand 2, single buffered']
    #allocation8 [shape = 'u8[512]{0}', space=vmem, size = 0x400, scoped, tag = 'input window, operand 3, single buffered']
    #allocation9 [shape = 's32[1]{0}', space=sflag, size = 0x4, scoped, tag = 'scoped memory for tpu_custom_call.1']
    #allocation10 [shape = 'u8[4096]{0}', space=vmem, size = 0x1000, scoped, tag = 'output window, operand 0, single buffered']
    %9 = vsyncpa [#allocation3], 0
    %10 = vsyncpa [#allocation6], 0
    %11 = vsyncpa [#allocation9], 0
    %12 = vsyncpa [#allocation4], 0
    // Predicated region
    $region2: #{tpu_custom_call.1} parent=1 // pred_check
      _
    $region3: #{tpu_custom_call.1} parent=1 // pred_check_branch
      %14 = sbr.rel (0) target = $region5
    $region4: #{tpu_custom_call.1} parent=1 // pred_region
      %s16 = ssub.s32 128, 128
      %17 = vsyncadd [#allocation3], %s16
      %s18 = sshll.u32 [#allocation2], 4
      %s19 = int_to_ptr.vmem [resolvable:$true] %s18
      %24 = dma.hbm_to_vmem [thread:$0]  %s0, 128, %s19, [#allocation3], 64, 64, 4
    $region5: #{tpu_custom_call.1} parent=1 // pred_fallthru
      _
    // Predicated region
    $region6: #{tpu_custom_call.1} parent=1 // pred_check
      _
    $region7: #{tpu_custom_call.1} parent=1 // pred_check_branch
      %26 = sbr.rel (0) target = $region9
    $region8: #{tpu_custom_call.1} parent=1 // pred_region
      %s28 = ssub.s32 128, 128
      %29 = vsyncadd [#allocation6], %s28
      %s30 = sshll.u32 [#allocation5], 4
      %s31 = int_to_ptr.vmem [resolvable:$true] %s30
      %36 = dma.hbm_to_vmem [thread:$0]  %s1, 128, %s31, [#allocation6], 64, 64, 4
    $region9: #{tpu_custom_call.1} parent=1 // pred_fallthru
      _
    // Predicated region
    $region10: #{tpu_custom_call.1} parent=1 // pred_check
      _
    $region11: #{tpu_custom_call.1} parent=1 // pred_check_branch
      %38 = sbr.rel (0) target = $region13
    $region12: #{tpu_custom_call.1} parent=1 // pred_region
      %s40 = ssub.s32 1024, 1024
      %41 = vsyncadd [#allocation6], %s40
      %s42 = sshll.u32 [#allocation7], 4
      %s43 = int_to_ptr.vmem [resolvable:$true] %s42
      %48 = dma.hbm_to_vmem [thread:$0]  %s2, 1024, %s43, [#allocation6], 64, 64, 4
    $region13: #{tpu_custom_call.1} parent=1 // pred_fallthru
      _
    // Predicated region
    $region14: #{tpu_custom_call.1} parent=1 // pred_check
      _
    $region15: #{tpu_custom_call.1} parent=1 // pred_check_branch
      %50 = sbr.rel (0) target = $region17
    $region16: #{tpu_custom_call.1} parent=1 // pred_region
      %s52 = ssub.s32 16, 16
      %53 = vsyncadd [#allocation9], %s52
      %s55 = sshll.u32 [#allocation8], 4
      %s56 = int_to_ptr.vmem [resolvable:$true] %s55
      %58 = dma.hbm_to_vmem [thread:$0]  %s3, 16, %s56, [#allocation9]
    $region17: #{tpu_custom_call.1} parent=1 // pred_fallthru
      _
    // Predicated region
    $region18: #{tpu_custom_call.1} parent=1 // pred_check
      _
    $region19: #{tpu_custom_call.1} parent=1 // pred_check_branch
      %60 = sbr.rel (0) target = $region21
    $region20: #{tpu_custom_call.1} parent=1 // pred_region
      %61 = dma.done [#allocation3], 128
    $region21: #{tpu_custom_call.1} parent=1 // pred_fallthru
      _
    // Predicated region
    $region22: #{tpu_custom_call.1} parent=1 // pred_check
      _
    $region23: #{tpu_custom_call.1} parent=1 // pred_check_branch
      %63 = sbr.rel (0) target = $region25
    $region24: #{tpu_custom_call.1} parent=1 // pred_region
      %64 = dma.done [#allocation6], 128
    $region25: #{tpu_custom_call.1} parent=1 // pred_fallthru
      _
    // Predicated region
    $region26: #{tpu_custom_call.1} parent=1 // pred_check
      _
    $region27: #{tpu_custom_call.1} parent=1 // pred_check_branch
      %66 = sbr.rel (0) target = $region29
    $region28: #{tpu_custom_call.1} parent=1 // pred_region
      %67 = dma.done [#allocation6], 1024
    $region29: #{tpu_custom_call.1} parent=1 // pred_fallthru
      _
    // Predicated region
    $region30: #{tpu_custom_call.1} parent=1 // pred_check
      _
    $region31: #{tpu_custom_call.1} parent=1 // pred_check_branch
      %69 = sbr.rel (0) target = $region33
    $region32: #{tpu_custom_call.1} parent=1 // pred_region
      %70 = dma.done [#allocation9], 16
    $region33: #{tpu_custom_call.1} parent=1 // pred_fallthru
      _
    %v72 = vld [vmem:[#allocation2] sm:$0xf]
    %v73 = vld [vmem:[#allocation2 + $0x4] sm:$0xf]
    %v74 = vld [vmem:[#allocation5] sm:$0xf]
    %v75 = vld [vmem:[#allocation5 + $0x4] sm:$0xf]
    %v76 = vld [vmem:[#allocation8] sm:$0x1]
    %v78 = vlaneseq
    %v79 = vshrl.u32 %v78, 7
    %v80 = vsub.s32 0, %v79
    %v81 = vrot.slane %v76, %v80
    %v85 = vunpack.c.l.b16 %v72
    %v86 = vunpack.c.l.b16 %v73
    %v87 = vpack.c.b16 %v86, %v85
    %v90 = vunpack.c.l.b16 %v74
    %v91 = vunpack.c.l.b16 %v75
    %v92 = vpack.c.b16 %v91, %v90
    %vm94 = vcmask 130048
    %v96 = vsel %vm94, %v87, 0
    %98 = vmatprep.subr.bf16.mxu0 0
    %99 = vmatpush1.bf16.msra.mxu0 %v92
    %100 = vmatprep.subr.bf16.mxu0 0
    %101 = vmatpush1.bf16.msra.mxu0 0
    %102 = vmatprep.subr.bf16.mxu0 0
    %103 = vmatpush1.bf16.msra.mxu0 0
    %104 = vmatprep.subr.bf16.mxu0 0
    %105 = vmatpush1.bf16.msra.mxu0 0
    %106 = vmatprep.subr.bf16.mxu0 0
    %107 = vmatpush1.bf16.msra.mxu0 0
    %108 = vmatprep.subr.bf16.mxu0 0
    %109 = vmatpush1.bf16.msra.mxu0 0
    %110 = vmatprep.subr.bf16.mxu0 0
    %111 = vmatpush1.bf16.msra.mxu0 0
    %112 = vmatprep.subr.bf16.mxu0 0
    %113 = vmatpush1.bf16.msra.mxu0 0
    %114 = vmatprep.subr.bf16.mxu0 0
    %115 = vmatpush1.bf16.msra.mxu0 0
    %116 = vmatprep.subr.bf16.mxu0 0
    %117 = vmatpush1.bf16.msra.mxu0 0
    %118 = vmatprep.subr.bf16.mxu0 0
    %119 = vmatpush1.bf16.msra.mxu0 0
    %120 = vmatprep.subr.bf16.mxu0 0
    %121 = vmatpush1.bf16.msra.mxu0 0
    %122 = vmatprep.subr.bf16.mxu0 0
    %123 = vmatpush1.bf16.msra.mxu0 0
    %124 = vmatprep.subr.bf16.mxu0 0
    %125 = vmatpush1.bf16.msra.mxu0 0
    %126 = vmatprep.subr.bf16.mxu0 0
    %127 = vmatpush1.bf16.msra.mxu0 0
    %128 = vmatprep.subr.bf16.mxu0 0
    %129 = vmatpush1.bf16.msra.mxu0 0
    %130 = vmatprep.mubr.bf16.mxu0 0
    %131 = vmatmul.mubr.bf16.gmra.mrb[0].mxu0 %v96
    %v132 = vpop.f32.mrb[0].mxu0
    %v133 = vadd.f32 %v81, %v132
    %v134 = vpop.f32.mrb[0].mxu0
    %v135 = vpop.f32.mrb[0].mxu0
    %v136 = vadd.f32 %v81, %v135
    %v137 = vpop.f32.mrb[0].mxu0
    %138 = vdwg.mxu0
    %v139 = vmax.f32 %v133, 0.0
    %v140 = vmax.f32 %v136, 0.0
    %v141 = vpack.c.bf16 %v140, %v139
    %v142 = vld [vmem:[#allocation7] sm:$0xf]
    %v143 = vld [vmem:[#allocation7 + $0x4] sm:$0xf]
    %v144 = vld [vmem:[#allocation7 + $0x8] sm:$0xf]
    %v145 = vld [vmem:[#allocation7 + $0xc] sm:$0xf]
    %v146 = vld [vmem:[#allocation7 + $0x10] sm:$0xf]
    %v147 = vld [vmem:[#allocation7 + $0x14] sm:$0xf]
    %v148 = vld [vmem:[#allocation7 + $0x18] sm:$0xf]
    %v149 = vld [vmem:[#allocation7 + $0x1c] sm:$0xf]
    %v150 = vld [vmem:[#allocation7 + $0x20] sm:$0xf]
    %v151 = vld [vmem:[#allocation7 + $0x24] sm:$0xf]
    %v152 = vld [vmem:[#allocation7 + $0x28] sm:$0xf]
    %v153 = vld [vmem:[#allocation7 + $0x2c] sm:$0xf]
    %v154 = vld [vmem:[#allocation7 + $0x30] sm:$0xf]
    %v155 = vld [vmem:[#allocation7 + $0x34] sm:$0xf]
    %v156 = vld [vmem:[#allocation7 + $0x38] sm:$0xf]
    %v157 = vld [vmem:[#allocation7 + $0x3c] sm:$0xf]
    %v174 = vunpack.c.l.b16 %v142
    %v175 = vunpack.c.l.b16 %v143
    %v176 = vunpack.c.l.b16 %v144
    %v177 = vunpack.c.l.b16 %v145
    %v178 = vunpack.c.l.b16 %v146
    %v179 = vunpack.c.l.b16 %v147
    %v180 = vunpack.c.l.b16 %v148
    %v181 = vunpack.c.l.b16 %v149
    %v182 = vunpack.c.l.b16 %v150
    %v183 = vunpack.c.l.b16 %v151
    %v184 = vunpack.c.l.b16 %v152
    %v185 = vunpack.c.l.b16 %v153
    %v186 = vunpack.c.l.b16 %v154
    %v187 = vunpack.c.l.b16 %v155
    %v188 = vunpack.c.l.b16 %v156
    %v189 = vunpack.c.l.b16 %v157
    %v190 = vpack.c.b16 %v175, %v174
    %v191 = vpack.c.b16 %v177, %v176
    %v192 = vpack.c.b16 %v179, %v178
    %v193 = vpack.c.b16 %v181, %v180
    %v194 = vpack.c.b16 %v183, %v182
    %v195 = vpack.c.b16 %v185, %v184
    %v196 = vpack.c.b16 %v187, %v186
    %v197 = vpack.c.b16 %v189, %v188
    %206 = vmatprep.subr.bf16.mxu0 0
    %207 = vmatpush1.bf16.msra.mxu0 %v190
    %208 = vmatprep.subr.bf16.mxu0 0
    %209 = vmatpush1.bf16.msra.mxu0 %v191
    %210 = vmatprep.subr.bf16.mxu0 0
    %211 = vmatpush1.bf16.msra.mxu0 %v192
    %212 = vmatprep.subr.bf16.mxu0 0
    %213 = vmatpush1.bf16.msra.mxu0 %v193
    %214 = vmatprep.subr.bf16.mxu0 0
    %215 = vmatpush1.bf16.msra.mxu0 %v194
    %216 = vmatprep.subr.bf16.mxu0 0
    %217 = vmatpush1.bf16.msra.mxu0 %v195
    %218 = vmatprep.subr.bf16.mxu0 0
    %219 = vmatpush1.bf16.msra.mxu0 %v196
    %220 = vmatprep.subr.bf16.mxu0 0
    %221 = vmatpush1.bf16.msra.mxu0 %v197
    %222 = vmatprep.subr.bf16.mxu0 0
    %223 = vmatpush1.bf16.msra.mxu0 0
    %224 = vmatprep.subr.bf16.mxu0 0
    %225 = vmatpush1.bf16.msra.mxu0 0
    %226 = vmatprep.subr.bf16.mxu0 0
    %227 = vmatpush1.bf16.msra.mxu0 0
    %228 = vmatprep.subr.bf16.mxu0 0
    %229 = vmatpush1.bf16.msra.mxu0 0
    %230 = vmatprep.subr.bf16.mxu0 0
    %231 = vmatpush1.bf16.msra.mxu0 0
    %232 = vmatprep.subr.bf16.mxu0 0
    %233 = vmatpush1.bf16.msra.mxu0 0
    %234 = vmatprep.subr.bf16.mxu0 0
    %235 = vmatpush1.bf16.msra.mxu0 0
    %236 = vmatprep.subr.bf16.mxu0 0
    %237 = vmatpush1.bf16.msra.mxu0 0
    %238 = vmatprep.mubr.bf16.mxu0 0
    %239 = vmatmul.mubr.bf16.gmra.mrb[0].mxu0 %v141
    %v240 = vpop.f32.mrb[0].mxu0
    %v241 = vadd.f32 0.0, %v240
    %v242 = vpop.f32.mrb[0].mxu0
    %v243 = vpop.f32.mrb[0].mxu0
    %v244 = vadd.f32 0.0, %v243
    %v245 = vpop.f32.mrb[0].mxu0
    %246 = vdwg.mxu0
    %v247 = vpack.c.bf16 %v244, %v241
    %v249 = vunpack.c.l.b16 %v247
    %v250 = vunpack.c.h.b16 %v247
    %v251 = vpack.c.b16 %v249, %v249
    %v252 = vpack.c.b16 %v250, %v250
    %255 = vst [vmem:[#allocation10] sm:$0xf] %v251
    %256 = vst [vmem:[#allocation10 + $0x4] sm:$0xf] %v252
    // Predicated region
    $region34: #{tpu_custom_call.1} parent=1 // pred_check
      _
    $region35: #{tpu_custom_call.1} parent=1 // pred_check_branch
      %258 = sbr.rel (0) target = $region37
    $region36: #{tpu_custom_call.1} parent=1 // pred_region
      %s260 = ssub.s32 128, 128
      %261 = vsyncadd [#allocation4], %s260
      %s262 = sshll.u32 [#allocation10], 4
      %s263 = int_to_ptr.vmem [resolvable:$true] %s262
      %268 = dma.vmem_to_hbm [thread:$0]  %s263, 128, %s4, [#allocation4], 64, 64, 4
    $region37: #{tpu_custom_call.1} parent=1 // pred_fallthru
      _
    // Predicated region
    $region38: #{tpu_custom_call.1} parent=1 // pred_check
      _
    $region39: #{tpu_custom_call.1} parent=1 // pred_check_branch
      %270 = sbr.rel (0) target = $region41
    $region40: #{tpu_custom_call.1} parent=1 // pred_region
      %271 = dma.done [#allocation4], 128
    $region41: #{tpu_custom_call.1} parent=1 // pred_fallthru
      _
    %272 = vsyncpa [#allocation3], 1
    %273 = vsyncpa [#allocation6], 1
    %274 = vsyncpa [#allocation9], 1
    %275 = vsyncpa [#allocation4], 1

// kernel: tpu_custom_call.1
$region0: #{tpu_custom_call.1}
  #allocation0 [shape = 'u32[]', space=smem, size = 0x4, offset = 0x4, fixed_abs, tag = 'smem constant byte address 0x4 - core index']
  #allocation1 [shape = 'u32[144,128]{1,0:T(1,128)}', space=vmem, size = 0x12000, scoped, tag = 'internal scratch']
  %s0 = inlined_call_operand.hbm [shape: bf16[16,16], index: 0, kind: input, shape index: {}]
  %s1 = inlined_call_operand.hbm [shape: bf16[16,128], index: 1, kind: input, shape index: {}]
  %s2 = inlined_call_operand.hbm [shape: bf16[128,128], index: 2, kind: input, shape index: {}]
  %s3 = inlined_call_operand.hbm [shape: f32[1,128], index: 3, kind: input, shape index: {}]
  %s4 = inlined_call_operand.hbm [shape: bf16[16,128], index: 4, kind: output, shape index: {}]
  %s5 = sld [smem:[#allocation0]]
  $region42: #{tpu_custom_call.1} parent=0
    _
  %s7 = ssub.s32 1, %s5
  %s8 = scalar_select 0, %s7, %s5
  $region1: #{tpu_custom_call.1} parent=0
    #allocation2 [shape = 'u8[4096]{0}', space=vmem, size = 0x1000, scoped, tag = 'input window, operand 0, single buffered']
    #allocation3 [shape = 's32[1]{0}', space=sflag, size = 0x4, scoped, tag = 'scoped memory for tpu_custom_call.1']
    #allocation4 [shape = 's32[1]{0}', space=sflag, size = 0x4, scoped, tag = 'scoped memory for tpu_custom_call.1']
    #allocation5 [shape = 'u8[4096]{0}', space=vmem, size = 0x1000, scoped, tag = 'input window, operand 1, single buffered']
    #allocation6 [shape = 's32[1]{0}', space=sflag, size = 0x4, scoped, tag = 'scoped memory for tpu_custom_call.1']
    #allocation7 [shape = 'u8[32768]{0}', space=vmem, size = 0x8000, scoped, tag = 'input window, operand 2, single buffered']
    #allocation8 [shape = 'u8[512]{0}', space=vmem, size = 0x400, scoped, tag = 'input window, operand 3, single buffered']
    #allocation9 [shape = 's32[1]{0}', space=sflag, size = 0x4, scoped, tag = 'scoped memory for tpu_custom_call.1']
    #allocation10 [shape = 'u8[4096]{0}', space=vmem, size = 0x1000, scoped, tag = 'output window, operand 0, single buffered']
    %9 = vsyncpa [#allocation3], 0
    %10 = vsyncpa [#allocation6], 0
    %11 = vsyncpa [#allocation9], 0
    %12 = vsyncpa [#allocation4], 0
    // Predicated region
    $region2: #{tpu_custom_call.1} parent=1 // pred_check
      _
    $region3: #{tpu_custom_call.1} parent=1 // pred_check_branch
      %14 = sbr.rel (0) target = $region5
    $region4: #{tpu_custom_call.1} parent=1 // pred_region
      %s16 = ssub.s32 128, 128
      %17 = vsyncadd [#allocation3], %s16
      %s18 = sshll.u32 [#allocation2], 4
      %s19 = int_to_ptr.vmem [resolvable:$true] %s18
      %24 = dma.hbm_to_vmem [thread:$0]  %s0, 128, %s19, [#allocation3], 64, 64, 4
    $region5: #{tpu_custom_call.1} parent=1 // pred_fallthru
      _
    // Predicated region
    $region6: #{tpu_custom_call.1} parent=1 // pred_check
      _
    $region7: #{tpu_custom_call.1} parent=1 // pred_check_branch
      %26 = sbr.rel (0) target = $region9
    $region8: #{tpu_custom_call.1} parent=1 // pred_region
      %s28 = ssub.s32 128, 128
      %29 = vsyncadd [#allocation6], %s28
      %s30 = sshll.u32 [#allocation5], 4
      %s31 = int_to_ptr.vmem [resolvable:$true] %s30
      %36 = dma.hbm_to_vmem [thread:$0]  %s1, 128, %s31, [#allocation6], 64, 64, 4
    $region9: #{tpu_custom_call.1} parent=1 // pred_fallthru
      _
    // Predicated region
    $region10: #{tpu_custom_call.1} parent=1 // pred_check
      _
    $region11: #{tpu_custom_call.1} parent=1 // pred_check_branch
      %38 = sbr.rel (0) target = $region13
    $region12: #{tpu_custom_call.1} parent=1 // pred_region
      %s40 = ssub.s32 1024, 1024
      %41 = vsyncadd [#allocation6], %s40
      %s42 = sshll.u32 [#allocation7], 4
      %s43 = int_to_ptr.vmem [resolvable:$true] %s42
      %48 = dma.hbm_to_vmem [thread:$0]  %s2, 1024, %s43, [#allocation6], 64, 64, 4
    $region13: #{tpu_custom_call.1} parent=1 // pred_fallthru
      _
    // Predicated region
    $region14: #{tpu_custom_call.1} parent=1 // pred_check
      _
    $region15: #{tpu_custom_call.1} parent=1 // pred_check_branch
      %50 = sbr.rel (0) target = $region17
    $region16: #{tpu_custom_call.1} parent=1 // pred_region
      %s52 = ssub.s32 16, 16
      %53 = vsyncadd [#allocation9], %s52
      %s55 = sshll.u32 [#allocation8], 4
      %s56 = int_to_ptr.vmem [resolvable:$true] %s55
      %58 = dma.hbm_to_vmem [thread:$0]  %s3, 16, %s56, [#allocation9]
    $region17: #{tpu_custom_call.1} parent=1 // pred_fallthru
      _
    // Predicated region
    $region18: #{tpu_custom_call.1} parent=1 // pred_check
      _
    $region19: #{tpu_custom_call.1} parent=1 // pred_check_branch
      %60 = sbr.rel (0) target = $region21
    $region20: #{tpu_custom_call.1} parent=1 // pred_region
      %61 = dma.done [#allocation3], 128
    $region21: #{tpu_custom_call.1} parent=1 // pred_fallthru
      _
    // Predicated region
    $region22: #{tpu_custom_call.1} parent=1 // pred_check
      _
    $region23: #{tpu_custom_call.1} parent=1 // pred_check_branch
      %63 = sbr.rel (0) target = $region25
    $region24: #{tpu_custom_call.1} parent=1 // pred_region
      %64 = dma.done [#allocation6], 128
    $region25: #{tpu_custom_call.1} parent=1 // pred_fallthru
      _
    // Predicated region
    $region26: #{tpu_custom_call.1} parent=1 // pred_check
      _
    $region27: #{tpu_custom_call.1} parent=1 // pred_check_branch
      %66 = sbr.rel (0) target = $region29
    $region28: #{tpu_custom_call.1} parent=1 // pred_region
      %67 = dma.done [#allocation6], 1024
    $region29: #{tpu_custom_call.1} parent=1 // pred_fallthru
      _
    // Predicated region
    $region30: #{tpu_custom_call.1} parent=1 // pred_check
      _
    $region31: #{tpu_custom_call.1} parent=1 // pred_check_branch
      %69 = sbr.rel (0) target = $region33
    $region32: #{tpu_custom_call.1} parent=1 // pred_region
      %70 = dma.done [#allocation9], 16
    $region33: #{tpu_custom_call.1} parent=1 // pred_fallthru
      _
    %v72 = vld [vmem:[#allocation2] sm:$0xf]
    %v73 = vld [vmem:[#allocation2 + $0x4] sm:$0xf]
    %v74 = vld [vmem:[#allocation5] sm:$0xf]
    %v75 = vld [vmem:[#allocation5 + $0x4] sm:$0xf]
    %v76 = vld [vmem:[#allocation8] sm:$0x1]
    %v78 = vlaneseq
    %v79 = vshrl.u32 %v78, 7
    %v80 = vsub.s32 0, %v79
    %v81 = vrot.slane %v76, %v80
    %v85 = vunpack.c.l.b16 %v72
    %v86 = vunpack.c.l.b16 %v73
    %v87 = vpack.c.b16 %v86, %v85
    %v90 = vunpack.c.l.b16 %v74
    %v91 = vunpack.c.l.b16 %v75
    %v92 = vpack.c.b16 %v91, %v90
    %vm94 = vcmask 130048
    %v96 = vsel %vm94, %v87, 0
    %98 = vmatprep.subr.bf16.mxu0 0
    %99 = vmatpush1.bf16.msra.mxu0 %v92
    %100 = vmatprep.subr.bf16.mxu0 0
    %101 = vmatpush1.bf16.msra.mxu0 0
    %102 = vmatprep.subr.bf16.mxu0 0
    %103 = vmatpush1.bf16.msra.mxu0 0
    %104 = vmatprep.subr.bf16.mxu0 0
    %105 = vmatpush1.bf16.msra.mxu0 0
    %106 = vmatprep.subr.bf16.mxu0 0
    %107 = vmatpush1.bf16.msra.mxu0 0
    %108 = vmatprep.subr.bf16.mxu0 0
    %109 = vmatpush1.bf16.msra.mxu0 0
    %110 = vmatprep.subr.bf16.mxu0 0
    %111 = vmatpush1.bf16.msra.mxu0 0
    %112 = vmatprep.subr.bf16.mxu0 0
    %113 = vmatpush1.bf16.msra.mxu0 0
    %114 = vmatprep.subr.bf16.mxu0 0
    %115 = vmatpush1.bf16.msra.mxu0 0
    %116 = vmatprep.subr.bf16.mxu0 0
    %117 = vmatpush1.bf16.msra.mxu0 0
    %118 = vmatprep.subr.bf16.mxu0 0
    %119 = vmatpush1.bf16.msra.mxu0 0
    %120 = vmatprep.subr.bf16.mxu0 0
    %121 = vmatpush1.bf16.msra.mxu0 0
    %122 = vmatprep.subr.bf16.mxu0 0
    %123 = vmatpush1.bf16.msra.mxu0 0
    %124 = vmatprep.subr.bf16.mxu0 0
    %125 = vmatpush1.bf16.msra.mxu0 0
    %126 = vmatprep.subr.bf16.mxu0 0
    %127 = vmatpush1.bf16.msra.mxu0 0
    %128 = vmatprep.subr.bf16.mxu0 0
    %129 = vmatpush1.bf16.msra.mxu0 0
    %130 = vmatprep.mubr.bf16.mxu0 0
    %131 = vmatmul.mubr.bf16.gmra.mrb[0].mxu0 %v96
    %v132 = vpop.f32.mrb[0].mxu0
    %v133 = vadd.f32 %v81, %v132
    %v134 = vpop.f32.mrb[0].mxu0
    %v135 = vpop.f32.mrb[0].mxu0
    %v136 = vadd.f32 %v81, %v135
    %v137 = vpop.f32.mrb[0].mxu0
    %138 = vdwg.mxu0
    %v139 = vmax.f32 %v133, 0.0
    %v140 = vmax.f32 %v136, 0.0
    %v141 = vpack.c.bf16 %v140, %v139
    %v142 = vld [vmem:[#allocation7] sm:$0xf]
    %v143 = vld [vmem:[#allocation7 + $0x4] sm:$0xf]
    %v144 = vld [vmem:[#allocation7 + $0x8] sm:$0xf]
    %v145 = vld [vmem:[#allocation7 + $0xc] sm:$0xf]
    %v146 = vld [vmem:[#allocation7 + $0x10] sm:$0xf]
    %v147 = vld [vmem:[#allocation7 + $0x14] sm:$0xf]
    %v148 = vld [vmem:[#allocation7 + $0x18] sm:$0xf]
    %v149 = vld [vmem:[#allocation7 + $0x1c] sm:$0xf]
    %v150 = vld [vmem:[#allocation7 + $0x20] sm:$0xf]
    %v151 = vld [vmem:[#allocation7 + $0x24] sm:$0xf]
    %v152 = vld [vmem:[#allocation7 + $0x28] sm:$0xf]
    %v153 = vld [vmem:[#allocation7 + $0x2c] sm:$0xf]
    %v154 = vld [vmem:[#allocation7 + $0x30] sm:$0xf]
    %v155 = vld [vmem:[#allocation7 + $0x34] sm:$0xf]
    %v156 = vld [vmem:[#allocation7 + $0x38] sm:$0xf]
    %v157 = vld [vmem:[#allocation7 + $0x3c] sm:$0xf]
    %v174 = vunpack.c.l.b16 %v142
    %v175 = vunpack.c.l.b16 %v143
    %v176 = vunpack.c.l.b16 %v144
    %v177 = vunpack.c.l.b16 %v145
    %v178 = vunpack.c.l.b16 %v146
    %v179 = vunpack.c.l.b16 %v147
    %v180 = vunpack.c.l.b16 %v148
    %v181 = vunpack.c.l.b16 %v149
    %v182 = vunpack.c.l.b16 %v150
    %v183 = vunpack.c.l.b16 %v151
    %v184 = vunpack.c.l.b16 %v152
    %v185 = vunpack.c.l.b16 %v153
    %v186 = vunpack.c.l.b16 %v154
    %v187 = vunpack.c.l.b16 %v155
    %v188 = vunpack.c.l.b16 %v156
    %v189 = vunpack.c.l.b16 %v157
    %v190 = vpack.c.b16 %v175, %v174
    %v191 = vpack.c.b16 %v177, %v176
    %v192 = vpack.c.b16 %v179, %v178
    %v193 = vpack.c.b16 %v181, %v180
    %v194 = vpack.c.b16 %v183, %v182
    %v195 = vpack.c.b16 %v185, %v184
    %v196 = vpack.c.b16 %v187, %v186
    %v197 = vpack.c.b16 %v189, %v188
    %206 = vmatprep.subr.bf16.mxu0 0
    %207 = vmatpush1.bf16.msra.mxu0 %v190
    %208 = vmatprep.subr.bf16.mxu0 0
    %209 = vmatpush1.bf16.msra.mxu0 %v191
    %210 = vmatprep.subr.bf16.mxu0 0
    %211 = vmatpush1.bf16.msra.mxu0 %v192
    %212 = vmatprep.subr.bf16.mxu0 0
    %213 = vmatpush1.bf16.msra.mxu0 %v193
    %214 = vmatprep.subr.bf16.mxu0 0
    %215 = vmatpush1.bf16.msra.mxu0 %v194
    %216 = vmatprep.subr.bf16.mxu0 0
    %217 = vmatpush1.bf16.msra.mxu0 %v195
    %218 = vmatprep.subr.bf16.mxu0 0
    %219 = vmatpush1.bf16.msra.mxu0 %v196
    %220 = vmatprep.subr.bf16.mxu0 0
    %221 = vmatpush1.bf16.msra.mxu0 %v197
    %222 = vmatprep.subr.bf16.mxu0 0
    %223 = vmatpush1.bf16.msra.mxu0 0
    %224 = vmatprep.subr.bf16.mxu0 0
    %225 = vmatpush1.bf16.msra.mxu0 0
    %226 = vmatprep.subr.bf16.mxu0 0
    %227 = vmatpush1.bf16.msra.mxu0 0
    %228 = vmatprep.subr.bf16.mxu0 0
    %229 = vmatpush1.bf16.msra.mxu0 0
    %230 = vmatprep.subr.bf16.mxu0 0
    %231 = vmatpush1.bf16.msra.mxu0 0
    %232 = vmatprep.subr.bf16.mxu0 0
    %233 = vmatpush1.bf16.msra.mxu0 0
    %234 = vmatprep.subr.bf16.mxu0 0
    %235 = vmatpush1.bf16.msra.mxu0 0
    %236 = vmatprep.subr.bf16.mxu0 0
    %237 = vmatpush1.bf16.msra.mxu0 0
    %238 = vmatprep.mubr.bf16.mxu0 0
    %239 = vmatmul.mubr.bf16.gmra.mrb[0].mxu0 %v141
    %v240 = vpop.f32.mrb[0].mxu0
    %v241 = vadd.f32 0.0, %v240
    %v242 = vpop.f32.mrb[0].mxu0
    %v243 = vpop.f32.mrb[0].mxu0
    %v244 = vadd.f32 0.0, %v243
    %v245 = vpop.f32.mrb[0].mxu0
    %246 = vdwg.mxu0
    %v247 = vpack.c.bf16 %v244, %v241
    %v249 = vunpack.c.l.b16 %v247
    %v250 = vunpack.c.h.b16 %v247
    %v251 = vpack.c.b16 %v249, %v249
    %v252 = vpack.c.b16 %v250, %v250
    %255 = vst [vmem:[#allocation10] sm:$0xf] %v251
    %256 = vst [vmem:[#allocation10 + $0x4] sm:$0xf] %v252
    // Predicated region
    $region34: #{tpu_custom_call.1} parent=1 // pred_check
      _
    $region35: #{tpu_custom_call.1} parent=1 // pred_check_branch
      %258 = sbr.rel (0) target = $region37
    $region36: #{tpu_custom_call.1} parent=1 // pred_region
      %s260 = ssub.s32 128, 128
      %261 = vsyncadd [#allocation4], %s260
      %s262 = sshll.u32 [#allocation10], 4
      %s263 = int_to_ptr.vmem [resolvable:$true] %s262
      %268 = dma.vmem_to_hbm [thread:$0]  %s263, 128, %s4, [#allocation4], 64, 64, 4
    $region37: #{tpu_custom_call.1} parent=1 // pred_fallthru
      _
    // Predicated region
    $region38: #{tpu_custom_call.1} parent=1 // pred_check
      _
    $region39: #{tpu_custom_call.1} parent=1 // pred_check_branch
      %270 = sbr.rel (0) target = $region41
    $region40: #{tpu_custom_call.1} parent=1 // pred_region
      %271 = dma.done [#allocation4], 128
    $region41: #{tpu_custom_call.1} parent=1 // pred_fallthru
      _
    %272 = vsyncpa [#allocation3], 1
    %273 = vsyncpa [#allocation6], 1
    %274 = vsyncpa [#allocation9], 1
    %275 = vsyncpa [#allocation4], 1

</llo_original>
